<compile_context>
chip_gen: v5e
topology: v5e:2x2
jax: 0.10.0
libtpu: 0.0.40
codegen_flags: <defaults>
</compile_context>

<pallas_src>
import jax
import jax.numpy as jnp
from jax.experimental import pallas as pl
from jax.experimental.pallas import tpu as pltpu


def _round_up(v, m):
    return (v + m - 1) // m * m


# ---------------------------------------------------------------------------
# Fused kernel: stem 3x3 conv (+ReLU) -> neck 1x1 (+ReLU) -> merged cls|reg head.
# One grid step processes one (batch, row-strip) tile of P = TH*Wp pixels.
# Channels-on-sublanes / pixels-on-lanes layout:
#   x_ref : (1, 3*Cin, P) bf16   xtap[dy*Cin+ci, h*Wp+w] = x_pad[ci, h+dy, w]
#   ws_ref: (3, C, 3*Cin) bf16   ws[dx, co, dy*Cin+ci]   = W[dy, dx, ci, co]
#   bs_ref: (C, 1) f32   wn_ref: (C, C) bf16 (= w_neck.T)   bn_ref: (C, 1) f32
#   wh_ref: (NCtot, C) bf16 (= [w_cls | w_reg].T)           bh_ref: (NCtot, 1) f32
#   o_ref : (1, NCtot, P) f32    NCHW-native strip, lane-dense store
# ---------------------------------------------------------------------------
def pulsenet_fused_kernel(x_ref, ws_ref, bs_ref, wn_ref, bn_ref, wh_ref, bh_ref,
                          o_ref):
    v = x_ref[0]                                   # (3*Cin, P) bf16, single VMEM load

    # Stem 3x3 conv: the dy/ci taps were pre-folded onto the sublane axis by the
    # wrapper; the dx taps are static lane shifts of this tiny bf16 tile.  The
    # circular wrap / row-end shift only pollutes the >=2 zero-padding "junk"
    # columns per image row (dx <= 2 <= pad width), which the wrapper discards.
    # (pltpu.roll(v, P - dx, axis=1) is the XLU-slot variant of the same shift.)
    acc = jnp.dot(ws_ref[0], v, preferred_element_type=jnp.float32)
    acc = acc + jnp.dot(ws_ref[1], jnp.roll(v, -1, axis=1),
                        preferred_element_type=jnp.float32)
    acc = acc + jnp.dot(ws_ref[2], jnp.roll(v, -2, axis=1),
                        preferred_element_type=jnp.float32)
    feat = jnp.maximum(acc + bs_ref[...], 0.0)     # (C, P) f32, never leaves VMEM

    # SimpleFPN 1x1 neck + ReLU (bf16 MXU operands, f32 accumulate / bias / ReLU).
    neck = jnp.maximum(
        jnp.dot(wn_ref[...], feat.astype(wn_ref.dtype),
                preferred_element_type=jnp.float32) + bn_ref[...], 0.0)

    # Detection head: merged (NC+4, C) x (C, P) matmul -> one lane-dense store.
    out = jnp.dot(wh_ref[...], neck.astype(wh_ref.dtype),
                  preferred_element_type=jnp.float32) + bh_ref[...]
    o_ref[0] = out.astype(o_ref.dtype)


# ---------------------------------------------------------------------------
# Wrapper: NCHW in / NCHW out, channels-first end to end, single pallas_call.
# ---------------------------------------------------------------------------
@jax.jit
def pulsenet_forward(images_nchw, params):
    """images: [B, 3, H, W] -> (cls [B,NC,H,W], reg [B,4,H,W])  (inference mode)."""
    x = images_nchw.astype(jnp.float32)            # NCHW, no layout transpose needed
    B, Cin, H, W = x.shape
    C = params["w_stem"].shape[-1]
    NC = params["w_cls"].shape[-1]
    NR = params["w_reg"].shape[-1]
    NCtot = NC + NR

    # ---- VMEM-budget-aware strip sizing ------------------------------------
    # Per-pixel VMEM: double-buffered bf16 input / f32 output blocks plus live
    # intermediates ~= 0.8 KiB; budget 12 MiB stays under v5e's 16 MiB default
    # scoped VMEM and well under v7x's 64 MiB physical per-TensorCore.
    PX_BYTES = 1024
    VMEM_BUDGET = 12 * 2 ** 20
    Wp = _round_up(W + 2, 16)          # width + SAME pad, padded so P_strip % 128 == 0
    target_px = min(8192, VMEM_BUDGET // PX_BYTES)
    TH = min(_round_up(H, 8), max(8, (target_px // Wp) // 8 * 8))
    # Megacore (v7x: 2 TCs/chip): with a tiny batch make sure there are >= 2 strips.
    if B * (_round_up(H, TH) // TH) < 2 and TH >= 16:
        TH = max(8, (TH // 2) // 8 * 8)
    Hp = _round_up(H, TH)              # pad H so strips tile it exactly
    S = Hp // TH
    P_strip = TH * Wp                  # multiple of 128 (TH % 8 == 0, Wp % 16 == 0)
    P_total = Hp * Wp

    # ---- layout prep (channels-first, bf16 MXU operands) -------------------
    # SAME-pad, then fold the 3 dy taps onto the channel (sublane) axis; the dx
    # taps are handled with lane shifts inside the kernel, so the tap tensor is
    # only 3x (not 9x) the tiny 3-channel input.
    # TODO(synk): fetch the dy halo in-kernel (pl.ANY + make_async_copy) to drop
    #             this remaining 3x input-side HBM traffic as well.
    x_pad = jnp.pad(x, ((0, 0), (0, 0), (1, 1 + Hp - H), (1, Wp - W - 1)))
    xtap = jnp.concatenate([x_pad[:, :, dy:dy + Hp, :] for dy in range(3)], axis=1)
    xtap = xtap.reshape(B, 3 * Cin, P_total).astype(jnp.bfloat16)

    # Weights pre-transposed for the (C, P) layout; bf16 matmul operands, f32 biases.
    ws = jnp.transpose(params["w_stem"], (1, 3, 0, 2)).reshape(3, C, 3 * Cin)
    ws = ws.astype(jnp.bfloat16)                               # ws[dx, co, dy*Cin+ci]
    bs = params["b_stem"].reshape(C, 1).astype(jnp.float32)
    wn = params["w_neck"].T.astype(jnp.bfloat16)               # (C, C)
    bn = params["b_neck"].reshape(C, 1).astype(jnp.float32)
    wh = jnp.concatenate([params["w_cls"], params["w_reg"]], axis=1).T
    wh = wh.astype(jnp.bfloat16)                               # (NCtot, C)
    bh = jnp.concatenate([params["b_cls"], params["b_reg"]]).reshape(NCtot, 1)
    bh = bh.astype(jnp.float32)

    flops = 2 * B * P_total * (9 * Cin * C + C * C + C * NCtot)
    bytes_accessed = (xtap.size * 2 + B * P_total * NCtot * 4
                      + (ws.size + wn.size + wh.size) * 2
                      + (bs.size + bn.size + bh.size) * 4)
    vmem_limit = int(min(48 * 2 ** 20, max(16 * 2 ** 20, 2 * PX_BYTES * P_strip)))

    out_flat = pl.pallas_call(
        pulsenet_fused_kernel,
        out_shape=jax.ShapeDtypeStruct((B, NCtot, P_total), jnp.float32),
        grid_spec=pltpu.PrefetchScalarGridSpec(
            num_scalar_prefetch=0,
            grid=(B, S),
            in_specs=[
                pl.BlockSpec((1, 3 * Cin, P_strip), lambda b, s: (b, 0, s)),
                pl.BlockSpec((3, C, 3 * Cin), lambda b, s: (0, 0, 0)),
                pl.BlockSpec((C, 1), lambda b, s: (0, 0)),
                pl.BlockSpec((C, C), lambda b, s: (0, 0)),
                pl.BlockSpec((C, 1), lambda b, s: (0, 0)),
                pl.BlockSpec((NCtot, C), lambda b, s: (0, 0)),
                pl.BlockSpec((NCtot, 1), lambda b, s: (0, 0)),
            ],
            out_specs=pl.BlockSpec((1, NCtot, P_strip), lambda b, s: (b, 0, s)),
        ),
        compiler_params=pltpu.CompilerParams(
            dimension_semantics=("parallel", "parallel"),
            vmem_limit_bytes=vmem_limit),
        cost_estimate=pl.CostEstimate(flops=flops, transcendentals=0,
                                      bytes_accessed=bytes_accessed),
    )(xtap, ws, bs, wn, bn, wh, bh)

    # Output is already NCHW: drop padded rows / junk columns, split cls | reg.
    out = out_flat.reshape(B, NCtot, Hp, Wp)[:, :, :H, :W]
    return out[:, :NC], out[:, NC:]


# ---------------------------------------------------------------------------
# Parameters + plain-JAX reference (for a correctness check).
# ---------------------------------------------------------------------------
def init_params(key, *, in_ch=3, out_ch=32, num_classes=20):
    ks = jax.random.split(key, 8)
    s = 0.05
    return {
        "w_stem": jax.random.normal(ks[0], (3, 3, in_ch, out_ch), jnp.float32) * s,
        "b_stem": jax.random.normal(ks[1], (out_ch,), jnp.float32) * s,
        "w_neck": jax.random.normal(ks[2], (out_ch, out_ch), jnp.float32) * s,
        "b_neck": jax.random.normal(ks[3], (out_ch,), jnp.float32) * s,
        "w_cls": jax.random.normal(ks[4], (out_ch, num_classes), jnp.float32) * s,
        "b_cls": jax.random.normal(ks[5], (num_classes,), jnp.float32) * s,
        "w_reg": jax.random.normal(ks[6], (out_ch, 4), jnp.float32) * s,
        "b_reg": jax.random.normal(ks[7], (4,), jnp.float32) * s,
    }


def _reference_forward(images_nchw, params):
    x = jnp.transpose(images_nchw, (0, 2, 3, 1)).astype(jnp.float32)
    feat = jax.lax.conv_general_dilated(
        x, params["w_stem"], window_strides=(1, 1), padding="SAME",
        dimension_numbers=("NHWC", "HWIO", "NHWC"))
    feat = jnp.maximum(feat + params["b_stem"], 0.0)
    neck = jnp.maximum(jnp.einsum("bhwc,cd->bhwd", feat, params["w_neck"])
                       + params["b_neck"], 0.0)
    cls = jnp.einsum("bhwc,cd->bhwd", neck, params["w_cls"]) + params["b_cls"]
    reg = jnp.einsum("bhwc,cd->bhwd", neck, params["w_reg"]) + params["b_reg"]
    return (jnp.transpose(cls, (0, 3, 1, 2)), jnp.transpose(reg, (0, 3, 1, 2)))


if __name__ == "__main__":
    key = jax.random.PRNGKey(0)
    k_img, k_par = jax.random.split(key)
    B, CIN, H, W = 2, 3, 16, 16
    NUM_CLASSES = 20
    images = jax.random.normal(k_img, (B, CIN, H, W), jnp.float32)
    params = init_params(k_par, in_ch=CIN, out_ch=32, num_classes=NUM_CLASSES)

    cls_out, reg_out = pulsenet_forward(images, params)
    jax.block_until_ready((cls_out, reg_out))

    cls_ref, reg_ref = _reference_forward(images, params)
    assert cls_out.shape == (B, NUM_CLASSES, H, W) and reg_out.shape == (B, 4, H, W)
    # bf16 MXU operands with f32 accumulation -> loosened tolerance vs f32 reference.
    assert jnp.allclose(cls_out, cls_ref, atol=2e-2, rtol=2e-2)
    assert jnp.allclose(reg_out, reg_ref, atol=2e-2, rtol=2e-2)
    print("KERNEL_OK")
</pallas_src>

<mosaic_0001>
module attributes {stable_mosaic.version = 11 : i64} {
  func.func @pulsenet_fused_kernel(%arg0: i32, %arg1: i32, %arg2: memref<1x9x512xbf16, #tpu.memory_space<vmem>>, %arg3: memref<3x32x9xbf16, #tpu.memory_space<vmem>>, %arg4: memref<32x1xf32, #tpu.memory_space<vmem>>, %arg5: memref<32x32xbf16, #tpu.memory_space<vmem>>, %arg6: memref<32x1xf32, #tpu.memory_space<vmem>>, %arg7: memref<24x32xbf16, #tpu.memory_space<vmem>>, %arg8: memref<24x1xf32, #tpu.memory_space<vmem>>, %arg9: memref<1x24x512xf32, #tpu.memory_space<vmem>>) attributes {dimension_semantics = [#tpu.dimension_semantics<parallel>, #tpu.dimension_semantics<parallel>], iteration_bounds = array<i64: 2, 1>, scalar_prefetch = 0 : i64, scratch_operands = 0 : i64, tpu.core_type = #tpu.core_type<tc>, window_params = [{transform_indices = @transform_0, window_bounds = array<i64: 1, 9, 512>}, {pipeline_mode = #tpu.pipeline_mode<synchronous>, transform_indices = @transform_1, window_bounds = array<i64: 3, 32, 9>}, {pipeline_mode = #tpu.pipeline_mode<synchronous>, transform_indices = @transform_2, window_bounds = array<i64: 32, 1>}, {pipeline_mode = #tpu.pipeline_mode<synchronous>, transform_indices = @transform_3, window_bounds = array<i64: 32, 32>}, {pipeline_mode = #tpu.pipeline_mode<synchronous>, transform_indices = @transform_4, window_bounds = array<i64: 32, 1>}, {pipeline_mode = #tpu.pipeline_mode<synchronous>, transform_indices = @transform_5, window_bounds = array<i64: 24, 32>}, {pipeline_mode = #tpu.pipeline_mode<synchronous>, transform_indices = @transform_6, window_bounds = array<i64: 24, 1>}, {transform_indices = @transform_7, window_bounds = array<i64: 1, 24, 512>}]} {
    %c0 = arith.constant 0 : index
    %c0_0 = arith.constant 0 : index
    %c0_1 = arith.constant 0 : index
    %0 = vector.load %arg2[%c0, %c0_0, %c0_1] : memref<1x9x512xbf16, #tpu.memory_space<vmem>>, vector<1x9x512xbf16>
    %1 = vector.shape_cast %0 : vector<1x9x512xbf16> to vector<9x512xbf16>
    %c0_2 = arith.constant 0 : index
    %c0_3 = arith.constant 0 : index
    %c0_4 = arith.constant 0 : index
    %2 = vector.load %arg3[%c0_2, %c0_3, %c0_4] : memref<3x32x9xbf16, #tpu.memory_space<vmem>>, vector<1x32x9xbf16>
    %3 = vector.shape_cast %2 : vector<1x32x9xbf16> to vector<32x9xbf16>
    %cst = arith.constant dense<0.000000e+00> : vector<32x512xf32>
    %4 = tpu.matmul %3, %1, %cst {dimension_numbers = #tpu.dot_dimension_numbers<[1], [0], [0], [1], [0, 0, 1, 1], [], []>} : vector<32x9xbf16>, vector<9x512xbf16>, vector<32x512xf32> -> vector<32x512xf32>
    %c1 = arith.constant 1 : index
    %c0_5 = arith.constant 0 : index
    %c0_6 = arith.constant 0 : index
    %5 = vector.load %arg3[%c1, %c0_5, %c0_6] : memref<3x32x9xbf16, #tpu.memory_space<vmem>>, vector<1x32x9xbf16>
    %6 = vector.shape_cast %5 : vector<1x32x9xbf16> to vector<32x9xbf16>
    %7 = vector.extract_strided_slice %1 {offsets = [0, 1], sizes = [9, 511], strides = [1, 1]} : vector<9x512xbf16> to vector<9x511xbf16>
    %8 = vector.extract_strided_slice %1 {offsets = [0, 0], sizes = [9, 1], strides = [1, 1]} : vector<9x512xbf16> to vector<9x1xbf16>
    %9 = tpu.concatenate %7, %8 in 1 : vector<9x511xbf16>, vector<9x1xbf16> -> vector<9x512xbf16>
    %cst_7 = arith.constant dense<0.000000e+00> : vector<32x512xf32>
    %10 = tpu.matmul %6, %9, %cst_7 {dimension_numbers = #tpu.dot_dimension_numbers<[1], [0], [0], [1], [0, 0, 1, 1], [], []>} : vector<32x9xbf16>, vector<9x512xbf16>, vector<32x512xf32> -> vector<32x512xf32>
    %11 = arith.addf %4, %10 : vector<32x512xf32>
    %c2 = arith.constant 2 : index
    %c0_8 = arith.constant 0 : index
    %c0_9 = arith.constant 0 : index
    %12 = vector.load %arg3[%c2, %c0_8, %c0_9] : memref<3x32x9xbf16, #tpu.memory_space<vmem>>, vector<1x32x9xbf16>
    %13 = vector.shape_cast %12 : vector<1x32x9xbf16> to vector<32x9xbf16>
    %14 = vector.extract_strided_slice %1 {offsets = [0, 2], sizes = [9, 510], strides = [1, 1]} : vector<9x512xbf16> to vector<9x510xbf16>
    %15 = vector.extract_strided_slice %1 {offsets = [0, 0], sizes = [9, 2], strides = [1, 1]} : vector<9x512xbf16> to vector<9x2xbf16>
    %16 = tpu.concatenate %14, %15 in 1 : vector<9x510xbf16>, vector<9x2xbf16> -> vector<9x512xbf16>
    %cst_10 = arith.constant dense<0.000000e+00> : vector<32x512xf32>
    %17 = tpu.matmul %13, %16, %cst_10 {dimension_numbers = #tpu.dot_dimension_numbers<[1], [0], [0], [1], [0, 0, 1, 1], [], []>} : vector<32x9xbf16>, vector<9x512xbf16>, vector<32x512xf32> -> vector<32x512xf32>
    %18 = arith.addf %11, %17 : vector<32x512xf32>
    %c0_11 = arith.constant 0 : index
    %c0_12 = arith.constant 0 : index
    %19 = vector.load %arg4[%c0_11, %c0_12] : memref<32x1xf32, #tpu.memory_space<vmem>>, vector<32x1xf32>
    %20 = vector.broadcast %19 : vector<32x1xf32> to vector<32x512xf32>
    %21 = arith.addf %18, %20 : vector<32x512xf32>
    %cst_13 = arith.constant 0.000000e+00 : f32
    %22 = vector.broadcast %cst_13 : f32 to vector<32x512xf32>
    %23 = arith.maximumf %21, %22 : vector<32x512xf32>
    %c0_14 = arith.constant 0 : index
    %c0_15 = arith.constant 0 : index
    %24 = vector.load %arg5[%c0_14, %c0_15] : memref<32x32xbf16, #tpu.memory_space<vmem>>, vector<32x32xbf16>
    %25 = arith.truncf %23 : vector<32x512xf32> to vector<32x512xbf16>
    %cst_16 = arith.constant dense<0.000000e+00> : vector<32x512xf32>
    %26 = tpu.matmul %24, %25, %cst_16 {dimension_numbers = #tpu.dot_dimension_numbers<[1], [0], [0], [1], [0, 0, 1, 1], [], []>} : vector<32x32xbf16>, vector<32x512xbf16>, vector<32x512xf32> -> vector<32x512xf32>
    %c0_17 = arith.constant 0 : index
    %c0_18 = arith.constant 0 : index
    %27 = vector.load %arg6[%c0_17, %c0_18] : memref<32x1xf32, #tpu.memory_space<vmem>>, vector<32x1xf32>
    %28 = vector.broadcast %27 : vector<32x1xf32> to vector<32x512xf32>
    %29 = arith.addf %26, %28 : vector<32x512xf32>
    %cst_19 = arith.constant 0.000000e+00 : f32
    %30 = vector.broadcast %cst_19 : f32 to vector<32x512xf32>
    %31 = arith.maximumf %29, %30 : vector<32x512xf32>
    %c0_20 = arith.constant 0 : index
    %c0_21 = arith.constant 0 : index
    %32 = vector.load %arg7[%c0_20, %c0_21] : memref<24x32xbf16, #tpu.memory_space<vmem>>, vector<24x32xbf16>
    %33 = arith.truncf %31 : vector<32x512xf32> to vector<32x512xbf16>
    %cst_22 = arith.constant dense<0.000000e+00> : vector<24x512xf32>
    %34 = tpu.matmul %32, %33, %cst_22 {dimension_numbers = #tpu.dot_dimension_numbers<[1], [0], [0], [1], [0, 0, 1, 1], [], []>} : vector<24x32xbf16>, vector<32x512xbf16>, vector<24x512xf32> -> vector<24x512xf32>
    %c0_23 = arith.constant 0 : index
    %c0_24 = arith.constant 0 : index
    %35 = vector.load %arg8[%c0_23, %c0_24] : memref<24x1xf32, #tpu.memory_space<vmem>>, vector<24x1xf32>
    %36 = vector.broadcast %35 : vector<24x1xf32> to vector<24x512xf32>
    %37 = arith.addf %34, %36 : vector<24x512xf32>
    %c0_25 = arith.constant 0 : index
    %c0_26 = arith.constant 0 : index
    %c0_27 = arith.constant 0 : index
    %38 = vector.load %arg9[%c0_25, %c0_26, %c0_27] : memref<1x24x512xf32, #tpu.memory_space<vmem>>, vector<1x24x512xf32>
    %39 = vector.shape_cast %38 : vector<1x24x512xf32> to vector<24x512xf32>
    %40 = vector.shape_cast %37 : vector<24x512xf32> to vector<1x24x512xf32>
    tpu.vector_store %arg9[%c0_25, %c0_26, %c0_27], %40 {strides = array<i32>} : memref<1x24x512xf32, #tpu.memory_space<vmem>>, vector<1x24x512xf32>,
    return
  }
  func.func @transform_0(%arg0: i32, %arg1: i32) -> (i32, i32, i32) {
    %c0_i32 = arith.constant 0 : i32
    %c0_i32_0 = arith.constant 0 : i32
    return %arg0, %c0_i32, %arg1 : i32, i32, i32
  }
  func.func @transform_1(%arg0: i32, %arg1: i32) -> (i32, i32, i32) {
    %c0_i32 = arith.constant 0 : i32
    %c0_i32_0 = arith.constant 0 : i32
    %c0_i32_1 = arith.constant 0 : i32
    %c0_i32_2 = arith.constant 0 : i32
    return %c0_i32, %c0_i32_0, %c0_i32_1 : i32, i32, i32
  }
  func.func @transform_2(%arg0: i32, %arg1: i32) -> (i32, i32) {
    %c0_i32 = arith.constant 0 : i32
    %c0_i32_0 = arith.constant 0 : i32
    %c0_i32_1 = arith.constant 0 : i32
    return %c0_i32, %c0_i32_0 : i32, i32
  }
  func.func @transform_3(%arg0: i32, %arg1: i32) -> (i32, i32) {
    %c0_i32 = arith.constant 0 : i32
    %c0_i32_0 = arith.constant 0 : i32
    %c0_i32_1 = arith.constant 0 : i32
    return %c0_i32, %c0_i32_0 : i32, i32
  }
  func.func @transform_4(%arg0: i32, %arg1: i32) -> (i32, i32) {
    %c0_i32 = arith.constant 0 : i32
    %c0_i32_0 = arith.constant 0 : i32
    %c0_i32_1 = arith.constant 0 : i32
    return %c0_i32, %c0_i32_0 : i32, i32
  }
  func.func @transform_5(%arg0: i32, %arg1: i32) -> (i32, i32) {
    %c0_i32 = arith.constant 0 : i32
    %c0_i32_0 = arith.constant 0 : i32
    %c0_i32_1 = arith.constant 0 : i32
    return %c0_i32, %c0_i32_0 : i32, i32
  }
  func.func @transform_6(%arg0: i32, %arg1: i32) -> (i32, i32) {
    %c0_i32 = arith.constant 0 : i32
    %c0_i32_0 = arith.constant 0 : i32
    %c0_i32_1 = arith.constant 0 : i32
    return %c0_i32, %c0_i32_0 : i32, i32
  }
  func.func @transform_7(%arg0: i32, %arg1: i32) -> (i32, i32, i32) {
    %c0_i32 = arith.constant 0 : i32
    %c0_i32_0 = arith.constant 0 : i32
    return %arg0, %c0_i32, %arg1 : i32, i32, i32
  }
}

</mosaic_0001>

<llo_original>
// kernel: pulsenet_forward.1
$region0: #{pulsenet_forward.1}
  #allocation0 [shape = 'u32[]', space=smem, size = 0x4, offset = 0x4, fixed_abs, tag = 'smem constant byte address 0x4 - core index']
  #allocation1 [shape = 'u32[72,128]{1,0:T(1,128)}', space=vmem, size = 0x9000, scoped, tag = 'internal scratch']
  %s0 = inlined_call_operand.vmem [shape: bf16[2,9,512], index: 0, kind: input, shape index: {}]
  %s1 = inlined_call_operand.vmem [shape: bf16[3,32,9], index: 1, kind: input, shape index: {}]
  %s2 = inlined_call_operand.vmem [shape: f32[32,1], index: 2, kind: input, shape index: {}]
  %s3 = inlined_call_operand.vmem [shape: bf16[32,32], index: 3, kind: input, shape index: {}]
  %s4 = inlined_call_operand.vmem [shape: f32[32,1], index: 4, kind: input, shape index: {}]
  %s5 = inlined_call_operand.vmem [shape: bf16[24,32], index: 5, kind: input, shape index: {}]
  %s6 = inlined_call_operand.vmem [shape: f32[24,1], index: 6, kind: input, shape index: {}]
  %s7 = inlined_call_operand.vmem [shape: f32[2,24,512], index: 7, kind: output, shape index: {}]
  %s8 = sld [smem:[#allocation0]]
  $region61: #{pulsenet_forward.1} parent=0
    _
  %s10 = ssub.s32 1, %s8
  %s11 = scalar_select 0, %s10, %s8
  loop: start=0, step=1, limit=4
  $region2: #{pulsenet_forward.1} parent=0 // loop_pre_header
    _
  $region3: #{pulsenet_forward.1} parent=0 // loop_header
    %s13 = sphi 0, %s17
    %p14 = scmp.ge.s32.totalorder %s13, 4
    %s20 = sphi 0, %s32
    %s21 = sphi 0, %s28
    %s22 = sphi 0, %s20
    %s23 = sphi 0, %s21
    %s24 = sphi 0, %s22
    %s25 = sphi 0, %s23
    %s37 = sphi 0, %s39
    %s40 = sphi 0, %s37
    %s41 = sphi 0, %s40
    %s57 = sphi 0, %s41
    %s61 = sphi 0, %s61
    %s63 = sphi 0, %s61
    %s64 = sphi 0, %s63
    %s78 = sphi 0, %s64
    %s82 = sphi 0, %s82
    %s84 = sphi 0, %s82
    %s85 = sphi 0, %s84
    %s99 = sphi 0, %s85
    %s103 = sphi 0, %s103
    %s105 = sphi 0, %s103
    %s106 = sphi 0, %s105
    %s120 = sphi 0, %s106
    %s124 = sphi 0, %s124
    %s126 = sphi 0, %s124
    %s127 = sphi 0, %s126
    %s141 = sphi 0, %s127
    %s145 = sphi 0, %s145
    %s147 = sphi 0, %s145
    %s148 = sphi 0, %s147
    %s162 = sphi 0, %s148
    %s166 = sphi 0, %s166
    %s168 = sphi 0, %s166
    %s169 = sphi 0, %s168
    %s183 = sphi 0, %s169
    %s191 = sphi 0, %s193
    %s194 = sphi 0, %s191
    %s195 = sphi 0, %s194
    %s211 = sphi 0, %s195
  $region4: #{pulsenet_forward.1} parent=0 // loop_header_branch
    %16 = sbr.rel (%p14) target = $region8
  $region5: #{pulsenet_forward.1} parent=0 // loop_body
    %s18 = ssub.s32 %s13, 1
    %s19 = ssub.s32 %s13, 2
    %s26 = sadd.s32 1, %s21
    %p27 = scmp.ge.s32.totalorder %s26, 1
    %s28 = scalar_select %p27, 0, %s26
    %s29 = sadd.s32 1, %s20
    %s30 = scalar_select %p27, %s29, %s20
    %p31 = scmp.ge.s32.totalorder %s30, 2
    %s32 = scalar_select %p31, 0, %s30
    %s33 = ssub.s32 %s20, %s32
    %s34 = ssub.s32 %s21, %s28
    %s35 = sor.u32 %s33, %s34
    %p36 = scmp.eq.s32.totalorder %s35, 0
    %s38 = sadd.s32 %s37, 1
    %s39 = scalar_select %p36, %s37, %s38
    %p42 = pneg %p36
    %p43 = scmp.eq.s32.totalorder %s13, 1
    %p44 = por %p42, %p43
    %p45 = scmp.ne.s32.totalorder %s37, %s40
    %p46 = scmp.eq.s32.totalorder %s13, 0
    %p47 = por %p45, %p46
    %p48 = scmp.ne.s32.totalorder %s37, %s40
    %p49 = scmp.eq.s32.totalorder %s18, 1
    %p50 = por %p48, %p49
    %p51 = scmp.ne.s32.totalorder %s40, %s41
    %p52 = scmp.eq.s32.totalorder %s18, 0
    %p53 = por %p51, %p52
    %p54 = scmp.ne.s32.totalorder %s40, %s41
    %p55 = scmp.eq.s32.totalorder %s19, 1
    %p56 = por %p54, %p55
    %p58 = scmp.ne.s32.totalorder %s41, %s57
    %p59 = scmp.eq.s32.totalorder %s19, 0
    %p60 = por %p58, %p59
    %s62 = sadd.s32 %s61, 1
    %p65 = scmp.eq.s32.totalorder %s13, 1
    %p66 = scmp.ne.s32.totalorder %s61, %s63
    %p67 = scmp.eq.s32.totalorder %s13, 0
    %p68 = por %p66, %p67
    %p69 = scmp.ne.s32.totalorder %s61, %s63
    %p70 = scmp.eq.s32.totalorder %s18, 1
    %p71 = por %p69, %p70
    %p72 = scmp.ne.s32.totalorder %s63, %s64
    %p73 = scmp.eq.s32.totalorder %s18, 0
    %p74 = por %p72, %p73
    %p75 = scmp.ne.s32.totalorder %s63, %s64
    %p76 = scmp.eq.s32.totalorder %s19, 1
    %p77 = por %p75, %p76
    %p79 = scmp.ne.s32.totalorder %s64, %s78
    %p80 = scmp.eq.s32.totalorder %s19, 0
    %p81 = por %p79, %p80
    %s83 = sadd.s32 %s82, 1
    %p86 = scmp.eq.s32.totalorder %s13, 1
    %p87 = scmp.ne.s32.totalorder %s82, %s84
    %p88 = scmp.eq.s32.totalorder %s13, 0
    %p89 = por %p87, %p88
    %p90 = scmp.ne.s32.totalorder %s82, %s84
    %p91 = scmp.eq.s32.totalorder %s18, 1
    %p92 = por %p90, %p91
    %p93 = scmp.ne.s32.totalorder %s84, %s85
    %p94 = scmp.eq.s32.totalorder %s18, 0
    %p95 = por %p93, %p94
    %p96 = scmp.ne.s32.totalorder %s84, %s85
    %p97 = scmp.eq.s32.totalorder %s19, 1
    %p98 = por %p96, %p97
    %p100 = scmp.ne.s32.totalorder %s85, %s99
    %p101 = scmp.eq.s32.totalorder %s19, 0
    %p102 = por %p100, %p101
    %s104 = sadd.s32 %s103, 1
    %p107 = scmp.eq.s32.totalorder %s13, 1
    %p108 = scmp.ne.s32.totalorder %s103, %s105
    %p109 = scmp.eq.s32.totalorder %s13, 0
    %p110 = por %p108, %p109
    %p111 = scmp.ne.s32.totalorder %s103, %s105
    %p112 = scmp.eq.s32.totalorder %s18, 1
    %p113 = por %p111, %p112
    %p114 = scmp.ne.s32.totalorder %s105, %s106
    %p115 = scmp.eq.s32.totalorder %s18, 0
    %p116 = por %p114, %p115
    %p117 = scmp.ne.s32.totalorder %s105, %s106
    %p118 = scmp.eq.s32.totalorder %s19, 1
    %p119 = por %p117, %p118
    %p121 = scmp.ne.s32.totalorder %s106, %s120
    %p122 = scmp.eq.s32.totalorder %s19, 0
    %p123 = por %p121, %p122
    %s125 = sadd.s32 %s124, 1
    %p128 = scmp.eq.s32.totalorder %s13, 1
    %p129 = scmp.ne.s32.totalorder %s124, %s126
    %p130 = scmp.eq.s32.totalorder %s13, 0
    %p131 = por %p129, %p130
    %p132 = scmp.ne.s32.totalorder %s124, %s126
    %p133 = scmp.eq.s32.totalorder %s18, 1
    %p134 = por %p132, %p133
    %p135 = scmp.ne.s32.totalorder %s126, %s127
    %p136 = scmp.eq.s32.totalorder %s18, 0
    %p137 = por %p135, %p136
    %p138 = scmp.ne.s32.totalorder %s126, %s127
    %p139 = scmp.eq.s32.totalorder %s19, 1
    %p140 = por %p138, %p139
    %p142 = scmp.ne.s32.totalorder %s127, %s141
    %p143 = scmp.eq.s32.totalorder %s19, 0
    %p144 = por %p142, %p143
    %s146 = sadd.s32 %s145, 1
    %p149 = scmp.eq.s32.totalorder %s13, 1
    %p150 = scmp.ne.s32.totalorder %s145, %s147
    %p151 = scmp.eq.s32.totalorder %s13, 0
    %p152 = por %p150, %p151
    %p153 = scmp.ne.s32.totalorder %s145, %s147
    %p154 = scmp.eq.s32.totalorder %s18, 1
    %p155 = por %p153, %p154
    %p156 = scmp.ne.s32.totalorder %s147, %s148
    %p157 = scmp.eq.s32.totalorder %s18, 0
    %p158 = por %p156, %p157
    %p159 = scmp.ne.s32.totalorder %s147, %s148
    %p160 = scmp.eq.s32.totalorder %s19, 1
    %p161 = por %p159, %p160
    %p163 = scmp.ne.s32.totalorder %s148, %s162
    %p164 = scmp.eq.s32.totalorder %s19, 0
    %p165 = por %p163, %p164
    %s167 = sadd.s32 %s166, 1
    %p170 = scmp.eq.s32.totalorder %s13, 1
    %p171 = scmp.ne.s32.totalorder %s166, %s168
    %p172 = scmp.eq.s32.totalorder %s13, 0
    %p173 = por %p171, %p172
    %p174 = scmp.ne.s32.totalorder %s166, %s168
    %p175 = scmp.eq.s32.totalorder %s18, 1
    %p176 = por %p174, %p175
    %p177 = scmp.ne.s32.totalorder %s168, %s169
    %p178 = scmp.eq.s32.totalorder %s18, 0
    %p179 = por %p177, %p178
    %p180 = scmp.ne.s32.totalorder %s168, %s169
    %p181 = scmp.eq.s32.totalorder %s19, 1
    %p182 = por %p180, %p181
    %p184 = scmp.ne.s32.totalorder %s169, %s183
    %p185 = scmp.eq.s32.totalorder %s19, 0
    %p186 = por %p184, %p185
    %s187 = ssub.s32 %s20, %s32
    %s188 = ssub.s32 %s21, %s28
    %s189 = sor.u32 %s187, %s188
    %p190 = scmp.eq.s32.totalorder %s189, 0
    %s192 = sadd.s32 %s191, 1
    %s193 = scalar_select %p190, %s191, %s192
    %p196 = pneg %p190
    %p197 = scmp.eq.s32.totalorder %s13, 1
    %p198 = por %p196, %p197
    %p199 = scmp.ne.s32.totalorder %s191, %s194
    %p200 = scmp.eq.s32.totalorder %s13, 0
    %p201 = por %p199, %p200
    %p202 = scmp.ne.s32.totalorder %s191, %s194
    %p203 = scmp.eq.s32.totalorder %s18, 1
    %p204 = por %p202, %p203
    %p205 = scmp.ne.s32.totalorder %s194, %s195
    %p206 = scmp.eq.s32.totalorder %s18, 0
    %p207 = por %p205, %p206
    %p208 = scmp.ne.s32.totalorder %s194, %s195
    %p209 = scmp.eq.s32.totalorder %s19, 1
    %p210 = por %p208, %p209
    %p212 = scmp.ne.s32.totalorder %s195, %s211
    %p213 = scmp.eq.s32.totalorder %s19, 0
    %p214 = por %p212, %p213
    %p215 = scmp.le.s32.totalorder 1, %s13
    %p216 = scmp.lt.s32.totalorder %s13, 3
    %p217 = pnand %p215, %p216
    %p218 = pneg %p217
    // Predicated region
    $region9: #{pulsenet_forward.1} parent=5 // pred_check
      _
    $region10: #{pulsenet_forward.1} parent=5 // pred_check_branch
      %220 = sbr.rel (%p217) target = $region12
    $region11: #{pulsenet_forward.1} parent=5 // pred_region
      %s221 = ssub.s32 %s13, 1
      // Predicated region
      $region13: #{pulsenet_forward.1} parent=11 // pred_check
        %p222 = pneg %p74
      $region14: #{pulsenet_forward.1} parent=11 // pred_check_branch
        %224 = sbr.rel (%p222) target = $region16
      $region15: #{pulsenet_forward.1} parent=11 // pred_region
        _
      $region16: #{pulsenet_forward.1} parent=11 // pred_fallthru
        _
      // Predicated region
      $region17: #{pulsenet_forward.1} parent=11 // pred_check
        %p225 = pneg %p95
      $region18: #{pulsenet_forward.1} parent=11 // pred_check_branch
        %227 = sbr.rel (%p225) target = $region20
      $region19: #{pulsenet_forward.1} parent=11 // pred_region
        _
      $region20: #{pulsenet_forward.1} parent=11 // pred_fallthru
        _
      // Predicated region
      $region21: #{pulsenet_forward.1} parent=11 // pred_check
        %p228 = pneg %p116
      $region22: #{pulsenet_forward.1} parent=11 // pred_check_branch
        %230 = sbr.rel (%p228) target = $region24
      $region23: #{pulsenet_forward.1} parent=11 // pred_region
        _
      $region24: #{pulsenet_forward.1} parent=11 // pred_fallthru
        _
      // Predicated region
      $region25: #{pulsenet_forward.1} parent=11 // pred_check
        %p231 = pneg %p137
      $region26: #{pulsenet_forward.1} parent=11 // pred_check_branch
        %233 = sbr.rel (%p231) target = $region28
      $region27: #{pulsenet_forward.1} parent=11 // pred_region
        _
      $region28: #{pulsenet_forward.1} parent=11 // pred_fallthru
        _
      // Predicated region
      $region29: #{pulsenet_forward.1} parent=11 // pred_check
        %p234 = pneg %p158
      $region30: #{pulsenet_forward.1} parent=11 // pred_check_branch
        %236 = sbr.rel (%p234) target = $region32
      $region31: #{pulsenet_forward.1} parent=11 // pred_region
        _
      $region32: #{pulsenet_forward.1} parent=11 // pred_fallthru
        _
      // Predicated region
      $region33: #{pulsenet_forward.1} parent=11 // pred_check
        %p237 = pneg %p179
      $region34: #{pulsenet_forward.1} parent=11 // pred_check_branch
        %239 = sbr.rel (%p237) target = $region36
      $region35: #{pulsenet_forward.1} parent=11 // pred_region
        _
      $region36: #{pulsenet_forward.1} parent=11 // pred_fallthru
        _
    $region12: #{pulsenet_forward.1} parent=5 // pred_fallthru
      _
    %p240 = scmp.lt.s32.totalorder %s13, 2
    // Predicated region
    $region37: #{pulsenet_forward.1} parent=5 // pred_check
      %p241 = pneg %p240
    $region38: #{pulsenet_forward.1} parent=5 // pred_check_branch
      %243 = sbr.rel (%p241) target = $region40
    $region39: #{pulsenet_forward.1} parent=5 // pred_region
      // Predicated region
      $region41: #{pulsenet_forward.1} parent=39 // pred_check
        %p244 = pneg %p47
      $region42: #{pulsenet_forward.1} parent=39 // pred_check_branch
        %246 = sbr.rel (%p244) target = $region44
      $region43: #{pulsenet_forward.1} parent=39 // pred_region
        %s247 = smul.u32 4, %s21
        %p248 = scmp.lt.s32.totalorder %s20, 1
        %s249 = scalar_select %p248, %s20, 1
        %p250 = scmp.lt.s32.totalorder %s247, 3
        %s251 = scalar_select %p250, %s247, 3
        %s252 = smul.addr %s249, 8
        %s253 = sadd.s32 %s251, %s252
        %s254 = smul.addr %s253, 4
        %s255 = scalar_lea.vmem %s0, %s254
        %s256 = smul.u32 4, %s21
      $region44: #{pulsenet_forward.1} parent=39 // pred_fallthru
        _
    $region40: #{pulsenet_forward.1} parent=5 // pred_fallthru
      _
    %p257 = scmp.le.s32.totalorder 1, %s13
    %p258 = scmp.lt.s32.totalorder %s13, 3
    %p259 = pnand %p257, %p258
    %p260 = pneg %p259
    // Predicated region
    $region45: #{pulsenet_forward.1} parent=5 // pred_check
      _
    $region46: #{pulsenet_forward.1} parent=5 // pred_check_branch
      %262 = sbr.rel (%p259) target = $region48
    $region47: #{pulsenet_forward.1} parent=5 // pred_region
      %s263 = ssub.s32 %s13, 1
      %s264 = smul.u32 4, %s23
      %p265 = scmp.lt.s32.totalorder %s22, 1
      %s266 = scalar_select %p265, %s22, 1
      %p267 = scmp.lt.s32.totalorder %s264, 3
      %s268 = scalar_select %p267, %s264, 3
      %s269 = smul.addr %s266, 8
      %s270 = sadd.s32 %s268, %s269
      %s271 = smul.addr %s270, 4
      %s272 = scalar_lea.vmem %s0, %s271
      %p273 = pneg %p53
      %p274 = pneg %p50
      %p275 = pneg %p74
      %p276 = pneg %p71
      %p277 = pneg %p95
      %p278 = pneg %p92
      %p279 = pneg %p116
      %p280 = pneg %p113
      %p281 = pneg %p137
      %p282 = pneg %p134
      %p283 = pneg %p158
      %p284 = pneg %p155
      %p285 = pneg %p179
      %p286 = pneg %p176
      %p287 = pneg %p207
      %p288 = pneg %p204
      %s289 = smul.u32 4, %s23
      %p290 = scmp.lt.s32.totalorder %s22, 1
      %s291 = scalar_select %p290, %s22, 1
      %p292 = scmp.lt.s32.totalorder %s289, 3
      %s293 = scalar_select %p292, %s289, 3
      %s294 = smul.addr %s291, 12
      %s295 = sadd.s32 %s293, %s294
      %s296 = smul.addr %s295, 8
      %s297 = scalar_lea.vmem %s7, %s296
      %s298 = smul.u32 4, %s23
      %p299 = scmp.lt.s32.totalorder %s22, 1
      %s300 = scalar_select %p299, %s22, 1
      %p301 = scmp.lt.s32.totalorder %s298, 3
      %s302 = scalar_select %p301, %s298, 3
      %s303 = smul.addr %s300, 8
      %s304 = sadd.s32 %s302, %s303
      %s305 = smul.addr %s304, 4
      %s306 = scalar_lea.vmem %s0, %s305
      %s307 = smul.u32 4, %s23
      %s308 = smul.u32 4, %s23
      %p309 = scmp.lt.s32.totalorder %s22, 1
      %s310 = scalar_select %p309, %s22, 1
      %p311 = scmp.lt.s32.totalorder %s308, 3
      %s312 = scalar_select %p311, %s308, 3
      %s313 = smul.addr %s310, 12
      %s314 = sadd.s32 %s312, %s313
      %s315 = smul.addr %s314, 8
      %s316 = scalar_lea.vmem %s7, %s315
      %s317 = smul.u32 4, %s23
      %v319 = vld [vmem:[%s306] sm:$0xff]
      %v320 = vld [vmem:[%s306 + $0x8] sm:$0xff]
      %v321 = vld [vmem:[%s306 + $0x10] sm:$0x11]
      %v322 = vld [vmem:[%s306 + $0x18] sm:$0x11]
      %v323 = vld [vmem:[%s1] sm:$0xf]
      %v324 = vld [vmem:[%s1 + $0x4] sm:$0xf]
      %v325 = vld [vmem:[%s1 + $0x8] sm:$0xf]
      %v326 = vld [vmem:[%s1 + $0xc] sm:$0xf]
      %s327 = scalar_lea.vmem %s1, 16
      %v328 = vld [vmem:[%s327] sm:$0xf]
      %v329 = vld [vmem:[%s327 + $0x4] sm:$0xf]
      %v330 = vld [vmem:[%s327 + $0x8] sm:$0xf]
      %v331 = vld [vmem:[%s327 + $0xc] sm:$0xf]
      %v336 = vunpack.c.l.b16 %v319
      %v337 = vunpack.c.h.b16 %v319
      %v338 = vunpack.c.l.b16 %v320
      %v339 = vunpack.c.h.b16 %v320
      %v340 = vunpack.c.l.b16 %v321
      %v341 = vunpack.c.h.b16 %v321
      %v342 = vunpack.c.l.b16 %v322
      %v343 = vunpack.c.h.b16 %v322
      %v344 = vpack.c.b16 %v340, %v336
      %v345 = vpack.c.b16 %v341, %v337
      %v346 = vpack.c.b16 %v342, %v338
      %v347 = vpack.c.b16 %v343, %v339
      %348 = vrot.lane.b32.xlu0 %v344, 127
      %v349 = vpop.permute.xlu0 %348
      %350 = vrot.lane.b32.xlu0 %v345, 127
      %v351 = vpop.permute.xlu0 %350
      %352 = vrot.lane.b32.xlu0 %v346, 127
      %v353 = vpop.permute.xlu0 %352
      %354 = vrot.lane.b32.xlu0 %v347, 127
      %v355 = vpop.permute.xlu0 %354
      %vm356 = vcmask 1039360
      %v357 = vsel %vm356, %v349, %v351
      %v358 = vsel %vm356, %v351, %v353
      %v359 = vsel %vm356, %v353, %v355
      %vm360 = vcmask 1039360
      %v363 = vsel %vm360, %v355, %v349
      %v368 = vunpack.c.l.b16 %v328
      %v369 = vunpack.c.l.b16 %v329
      %v370 = vunpack.c.l.b16 %v330
      %v371 = vunpack.c.l.b16 %v331
      %v372 = vpack.c.b16 %v369, %v368
      %v373 = vpack.c.b16 %v371, %v370
      %vm374 = vcmask 72704
      %v376 = vsel %vm374, %v372, 0
      %v379 = vsel %vm374, %v373, 0
      %vm381 = vcmask 1043456
      %vm382 = vcmask 1044480
      %v383 = vsel %vm381, 4294967295, 65535
      %v384 = vsel %vm382, %v383, 0
      %v386 = vand.u32 %v357, %v384
      %v389 = vand.u32 %v358, %v384
      %v392 = vand.u32 %v359, %v384
      %v394 = vand.u32 %v363, %v384
      %396 = vmatpush.bf16.msra.mxu0 0
      %397 = vmatpush.bf16.msra.mxu0 0
      %398 = vmatpush.bf16.msra.mxu0 0
      %399 = vmatpush.bf16.msra.mxu0 0
      %400 = vmatpush.bf16.msra.mxu0 0
      %401 = vmatpush.bf16.msra.mxu0 0
      %402 = vmatpush.bf16.msra.mxu0 0
      %403 = vmatpush.bf16.msra.mxu0 %v386
      %404 = vmatmul.bf16.gmra.mxu0 %v376
      %v405 = vpop.f32.mrf.mxu0
      %v406 = vadd.f32 0.0, %v405
      %v407 = vpop.f32.mrf.mxu0
      %v408 = vadd.f32 0.0, %v407
      %409 = vmatmul.bf16.gmra.mxu0 %v379
      %v410 = vpop.f32.mrf.mxu0
      %v411 = vadd.f32 0.0, %v410
      %v412 = vpop.f32.mrf.mxu0
      %v413 = vadd.f32 0.0, %v412
      %414 = vdwg.mxu0
      %415 = vmatpush.bf16.msra.mxu0 0
      %416 = vmatpush.bf16.msra.mxu0 0
      %417 = vmatpush.bf16.msra.mxu0 0
      %418 = vmatpush.bf16.msra.mxu0 0
      %419 = vmatpush.bf16.msra.mxu0 0
      %420 = vmatpush.bf16.msra.mxu0 0
      %421 = vmatpush.bf16.msra.mxu0 0
      %422 = vmatpush.bf16.msra.mxu0 %v389
      %423 = vmatmul.bf16.gmra.mxu0 %v376
      %v424 = vpop.f32.mrf.mxu0
      %v425 = vadd.f32 0.0, %v424
      %v426 = vpop.f32.mrf.mxu0
      %v427 = vadd.f32 0.0, %v426
      %428 = vmatmul.bf16.gmra.mxu0 %v379
      %v429 = vpop.f32.mrf.mxu0
      %v430 = vadd.f32 0.0, %v429
      %v431 = vpop.f32.mrf.mxu0
      %v432 = vadd.f32 0.0, %v431
      %433 = vdwg.mxu0
      %434 = vmatpush.bf16.msra.mxu0 0
      %435 = vmatpush.bf16.msra.mxu0 0
      %436 = vmatpush.bf16.msra.mxu0 0
      %437 = vmatpush.bf16.msra.mxu0 0
      %438 = vmatpush.bf16.msra.mxu0 0
      %439 = vmatpush.bf16.msra.mxu0 0
      %440 = vmatpush.bf16.msra.mxu0 0
      %441 = vmatpush.bf16.msra.mxu0 %v392
      %442 = vmatmul.bf16.gmra.mxu0 %v376
      %v443 = vpop.f32.mrf.mxu0
      %v444 = vadd.f32 0.0, %v443
      %v445 = vpop.f32.mrf.mxu0
      %v446 = vadd.f32 0.0, %v445
      %447 = vmatmul.bf16.gmra.mxu0 %v379
      %v448 = vpop.f32.mrf.mxu0
      %v449 = vadd.f32 0.0, %v448
      %v450 = vpop.f32.mrf.mxu0
      %v451 = vadd.f32 0.0, %v450
      %452 = vdwg.mxu0
      %453 = vmatpush.bf16.msra.mxu0 0
      %454 = vmatpush.bf16.msra.mxu0 0
      %455 = vmatpush.bf16.msra.mxu0 0
      %456 = vmatpush.bf16.msra.mxu0 0
      %457 = vmatpush.bf16.msra.mxu0 0
      %458 = vmatpush.bf16.msra.mxu0 0
      %459 = vmatpush.bf16.msra.mxu0 0
      %460 = vmatpush.bf16.msra.mxu0 %v394
      %461 = vmatmul.bf16.gmra.mxu0 %v376
      %v462 = vpop.f32.mrf.mxu0
      %v463 = vadd.f32 0.0, %v462
      %v464 = vpop.f32.mrf.mxu0
      %v465 = vadd.f32 0.0, %v464
      %466 = vmatmul.bf16.gmra.mxu0 %v379
      %v467 = vpop.f32.mrf.mxu0
      %v468 = vadd.f32 0.0, %v467
      %v469 = vpop.f32.mrf.mxu0
      %v470 = vadd.f32 0.0, %v469
      %471 = vdwg.mxu0
      %v476 = vunpack.c.l.b16 %v323
      %v477 = vunpack.c.l.b16 %v324
      %v478 = vunpack.c.l.b16 %v325
      %v479 = vunpack.c.l.b16 %v326
      %v480 = vpack.c.b16 %v477, %v476
      %v481 = vpack.c.b16 %v479, %v478
      %v483 = vsel %vm374, %v480, 0
      %v486 = vsel %vm374, %v481, 0
      %v489 = vand.u32 %v344, %v384
      %v492 = vand.u32 %v345, %v384
      %v495 = vand.u32 %v346, %v384
      %v498 = vand.u32 %v347, %v384
      %500 = vmatpush.bf16.msra.mxu0 0
      %501 = vmatpush.bf16.msra.mxu0 0
      %502 = vmatpush.bf16.msra.mxu0 0
      %503 = vmatpush.bf16.msra.mxu0 0
      %504 = vmatpush.bf16.msra.mxu0 0
      %505 = vmatpush.bf16.msra.mxu0 0
      %506 = vmatpush.bf16.msra.mxu0 0
      %507 = vmatpush.bf16.msra.mxu0 %v489
      %508 = vmatmul.bf16.gmra.mxu0 %v483
      %v509 = vpop.f32.mrf.mxu0
      %v510 = vadd.f32 %v406, %v509
      %v511 = vpop.f32.mrf.mxu0
      %v512 = vadd.f32 %v408, %v511
      %513 = vmatmul.bf16.gmra.mxu0 %v486
      %v514 = vpop.f32.mrf.mxu0
      %v515 = vadd.f32 %v411, %v514
      %v516 = vpop.f32.mrf.mxu0
      %v517 = vadd.f32 %v413, %v516
      %518 = vdwg.mxu0
      %519 = vmatpush.bf16.msra.mxu0 0
      %520 = vmatpush.bf16.msra.mxu0 0
      %521 = vmatpush.bf16.msra.mxu0 0
      %522 = vmatpush.bf16.msra.mxu0 0
      %523 = vmatpush.bf16.msra.mxu0 0
      %524 = vmatpush.bf16.msra.mxu0 0
      %525 = vmatpush.bf16.msra.mxu0 0
      %526 = vmatpush.bf16.msra.mxu0 %v492
      %527 = vmatmul.bf16.gmra.mxu0 %v483
      %v528 = vpop.f32.mrf.mxu0
      %v529 = vadd.f32 %v425, %v528
      %v530 = vpop.f32.mrf.mxu0
      %v531 = vadd.f32 %v427, %v530
      %532 = vmatmul.bf16.gmra.mxu0 %v486
      %v533 = vpop.f32.mrf.mxu0
      %v534 = vadd.f32 %v430, %v533
      %v535 = vpop.f32.mrf.mxu0
      %v536 = vadd.f32 %v432, %v535
      %537 = vdwg.mxu0
      %538 = vmatpush.bf16.msra.mxu0 0
      %539 = vmatpush.bf16.msra.mxu0 0
      %540 = vmatpush.bf16.msra.mxu0 0
      %541 = vmatpush.bf16.msra.mxu0 0
      %542 = vmatpush.bf16.msra.mxu0 0
      %543 = vmatpush.bf16.msra.mxu0 0
      %544 = vmatpush.bf16.msra.mxu0 0
      %545 = vmatpush.bf16.msra.mxu0 %v495
      %546 = vmatmul.bf16.gmra.mxu0 %v483
      %v547 = vpop.f32.mrf.mxu0
      %v548 = vadd.f32 %v444, %v547
      %v549 = vpop.f32.mrf.mxu0
      %v550 = vadd.f32 %v446, %v549
      %551 = vmatmul.bf16.gmra.mxu0 %v486
      %v552 = vpop.f32.mrf.mxu0
      %v553 = vadd.f32 %v449, %v552
      %v554 = vpop.f32.mrf.mxu0
      %v555 = vadd.f32 %v451, %v554
      %556 = vdwg.mxu0
      %557 = vmatpush.bf16.msra.mxu0 0
      %558 = vmatpush.bf16.msra.mxu0 0
      %559 = vmatpush.bf16.msra.mxu0 0
      %560 = vmatpush.bf16.msra.mxu0 0
      %561 = vmatpush.bf16.msra.mxu0 0
      %562 = vmatpush.bf16.msra.mxu0 0
      %563 = vmatpush.bf16.msra.mxu0 0
      %564 = vmatpush.bf16.msra.mxu0 %v498
      %565 = vmatmul.bf16.gmra.mxu0 %v483
      %v566 = vpop.f32.mrf.mxu0
      %v567 = vadd.f32 %v463, %v566
      %v568 = vpop.f32.mrf.mxu0
      %v569 = vadd.f32 %v465, %v568
      %570 = vmatmul.bf16.gmra.mxu0 %v486
      %v571 = vpop.f32.mrf.mxu0
      %v572 = vadd.f32 %v468, %v571
      %v573 = vpop.f32.mrf.mxu0
      %v574 = vadd.f32 %v470, %v573
      %575 = vdwg.mxu0
      %s576 = scalar_lea.vmem %s1, 32
      %v577 = vld [vmem:[%s576] sm:$0xf]
      %v578 = vld [vmem:[%s576 + $0x4] sm:$0xf]
      %v579 = vld [vmem:[%s576 + $0x8] sm:$0xf]
      %v580 = vld [vmem:[%s576 + $0xc] sm:$0xf]
      %581 = vrot.lane.b32.xlu0 %v344, 126
      %v582 = vpop.permute.xlu0 %581
      %583 = vrot.lane.b32.xlu0 %v345, 126
      %v584 = vpop.permute.xlu0 %583
      %585 = vrot.lane.b32.xlu0 %v346, 126
      %v586 = vpop.permute.xlu0 %585
      %587 = vrot.lane.b32.xlu0 %v347, 126
      %v588 = vpop.permute.xlu0 %587
      %vm589 = vcmask 1031168
      %v590 = vsel %vm589, %v582, %v584
      %v591 = vsel %vm589, %v584, %v586
      %v592 = vsel %vm589, %v586, %v588
      %vm593 = vcmask 1031168
      %v596 = vsel %vm593, %v588, %v582
      %v601 = vunpack.c.l.b16 %v577
      %v602 = vunpack.c.l.b16 %v578
      %v603 = vunpack.c.l.b16 %v579
      %v604 = vunpack.c.l.b16 %v580
      %v605 = vpack.c.b16 %v602, %v601
      %v606 = vpack.c.b16 %v604, %v603
      %v608 = vsel %vm374, %v605, 0
      %v611 = vsel %vm374, %v606, 0
      %v614 = vand.u32 %v590, %v384
      %v617 = vand.u32 %v591, %v384
      %v620 = vand.u32 %v592, %v384
      %v622 = vand.u32 %v596, %v384
      %624 = vmatpush.bf16.msra.mxu0 0
      %625 = vmatpush.bf16.msra.mxu0 0
      %626 = vmatpush.bf16.msra.mxu0 0
      %627 = vmatpush.bf16.msra.mxu0 0
      %628 = vmatpush.bf16.msra.mxu0 0
      %629 = vmatpush.bf16.msra.mxu0 0
      %630 = vmatpush.bf16.msra.mxu0 0
      %631 = vmatpush.bf16.msra.mxu0 %v614
      %632 = vmatmul.bf16.gmra.mxu0 %v608
      %v633 = vpop.f32.mrf.mxu0
      %v634 = vadd.f32 0.0, %v633
      %v635 = vpop.f32.mrf.mxu0
      %v636 = vadd.f32 0.0, %v635
      %637 = vmatmul.bf16.gmra.mxu0 %v611
      %v638 = vpop.f32.mrf.mxu0
      %v639 = vadd.f32 0.0, %v638
      %v640 = vpop.f32.mrf.mxu0
      %v641 = vadd.f32 0.0, %v640
      %642 = vdwg.mxu0
      %643 = vmatpush.bf16.msra.mxu0 0
      %644 = vmatpush.bf16.msra.mxu0 0
      %645 = vmatpush.bf16.msra.mxu0 0
      %646 = vmatpush.bf16.msra.mxu0 0
      %647 = vmatpush.bf16.msra.mxu0 0
      %648 = vmatpush.bf16.msra.mxu0 0
      %649 = vmatpush.bf16.msra.mxu0 0
      %650 = vmatpush.bf16.msra.mxu0 %v617
      %651 = vmatmul.bf16.gmra.mxu0 %v608
      %v652 = vpop.f32.mrf.mxu0
      %v653 = vadd.f32 0.0, %v652
      %v654 = vpop.f32.mrf.mxu0
      %v655 = vadd.f32 0.0, %v654
      %656 = vmatmul.bf16.gmra.mxu0 %v611
      %v657 = vpop.f32.mrf.mxu0
      %v658 = vadd.f32 0.0, %v657
      %v659 = vpop.f32.mrf.mxu0
      %v660 = vadd.f32 0.0, %v659
      %661 = vdwg.mxu0
      %662 = vmatpush.bf16.msra.mxu0 0
      %663 = vmatpush.bf16.msra.mxu0 0
      %664 = vmatpush.bf16.msra.mxu0 0
      %665 = vmatpush.bf16.msra.mxu0 0
      %666 = vmatpush.bf16.msra.mxu0 0
      %667 = vmatpush.bf16.msra.mxu0 0
      %668 = vmatpush.bf16.msra.mxu0 0
      %669 = vmatpush.bf16.msra.mxu0 %v620
      %670 = vmatmul.bf16.gmra.mxu0 %v608
      %v671 = vpop.f32.mrf.mxu0
      %v672 = vadd.f32 0.0, %v671
      %v673 = vpop.f32.mrf.mxu0
      %v674 = vadd.f32 0.0, %v673
      %675 = vmatmul.bf16.gmra.mxu0 %v611
      %v676 = vpop.f32.mrf.mxu0
      %v677 = vadd.f32 0.0, %v676
      %v678 = vpop.f32.mrf.mxu0
      %v679 = vadd.f32 0.0, %v678
      %680 = vdwg.mxu0
      %681 = vmatpush.bf16.msra.mxu0 0
      %682 = vmatpush.bf16.msra.mxu0 0
      %683 = vmatpush.bf16.msra.mxu0 0
      %684 = vmatpush.bf16.msra.mxu0 0
      %685 = vmatpush.bf16.msra.mxu0 0
      %686 = vmatpush.bf16.msra.mxu0 0
      %687 = vmatpush.bf16.msra.mxu0 0
      %688 = vmatpush.bf16.msra.mxu0 %v622
      %689 = vmatmul.bf16.gmra.mxu0 %v608
      %v690 = vpop.f32.mrf.mxu0
      %v691 = vadd.f32 0.0, %v690
      %v692 = vpop.f32.mrf.mxu0
      %v693 = vadd.f32 0.0, %v692
      %694 = vmatmul.bf16.gmra.mxu0 %v611
      %v695 = vpop.f32.mrf.mxu0
      %v696 = vadd.f32 0.0, %v695
      %v697 = vpop.f32.mrf.mxu0
      %v698 = vadd.f32 0.0, %v697
      %699 = vdwg.mxu0
      %v700 = vadd.f32 %v510, %v634
      %v701 = vadd.f32 %v529, %v653
      %v702 = vadd.f32 %v548, %v672
      %v703 = vadd.f32 %v567, %v691
      %v704 = vadd.f32 %v512, %v636
      %v705 = vadd.f32 %v531, %v655
      %v706 = vadd.f32 %v550, %v674
      %v707 = vadd.f32 %v569, %v693
      %v708 = vadd.f32 %v515, %v639
      %v709 = vadd.f32 %v534, %v658
      %v710 = vadd.f32 %v553, %v677
      %v711 = vadd.f32 %v572, %v696
      %v712 = vadd.f32 %v517, %v641
      %v713 = vadd.f32 %v536, %v660
      %v714 = vadd.f32 %v555, %v679
      %v715 = vadd.f32 %v574, %v698
      %v716 = vld [vmem:[%s2] sm:$0xff]
      %v717 = vld [vmem:[%s2 + $0x8] sm:$0xff]
      %v718 = vld [vmem:[%s2 + $0x10] sm:$0xff]
      %v719 = vld [vmem:[%s2 + $0x18] sm:$0xff]
      %721 = vset.pattern.permute.xlu0 0
      %722 = vperm.xlu0 %721, %v716
      %v723 = vpop.permute.xlu0 %722
      %726 = vset.pattern.permute.xlu0 0
      %727 = vperm.xlu0 %726, %v717
      %v728 = vpop.permute.xlu0 %727
      %731 = vset.pattern.permute.xlu0 0
      %732 = vperm.xlu0 %731, %v718
      %v733 = vpop.permute.xlu0 %732
      %736 = vset.pattern.permute.xlu0 0
      %737 = vperm.xlu0 %736, %v719
      %v738 = vpop.permute.xlu0 %737
      %v740 = vadd.f32 %v700, %v723
      %v741 = vadd.f32 %v701, %v723
      %v742 = vadd.f32 %v702, %v723
      %v743 = vadd.f32 %v703, %v723
      %v744 = vadd.f32 %v704, %v728
      %v745 = vadd.f32 %v705, %v728
      %v746 = vadd.f32 %v706, %v728
      %v747 = vadd.f32 %v707, %v728
      %v748 = vadd.f32 %v708, %v733
      %v749 = vadd.f32 %v709, %v733
      %v750 = vadd.f32 %v710, %v733
      %v751 = vadd.f32 %v711, %v733
      %v752 = vadd.f32 %v712, %v738
      %v753 = vadd.f32 %v713, %v738
      %v754 = vadd.f32 %v714, %v738
      %v755 = vadd.f32 %v715, %v738
      %v756 = vmax.f32 %v740, 0.0
      %v757 = vmax.f32 %v741, 0.0
      %v758 = vmax.f32 %v742, 0.0
      %v759 = vmax.f32 %v743, 0.0
      %v760 = vmax.f32 %v744, 0.0
      %v761 = vmax.f32 %v745, 0.0
      %v762 = vmax.f32 %v746, 0.0
      %v763 = vmax.f32 %v747, 0.0
      %v764 = vmax.f32 %v748, 0.0
      %v765 = vmax.f32 %v749, 0.0
      %v766 = vmax.f32 %v750, 0.0
      %v767 = vmax.f32 %v751, 0.0
      %v768 = vmax.f32 %v752, 0.0
      %v769 = vmax.f32 %v753, 0.0
      %v770 = vmax.f32 %v754, 0.0
      %v771 = vmax.f32 %v755, 0.0
      %v772 = vld [vmem:[%s3] sm:$0xf]
      %v773 = vld [vmem:[%s3 + $0x4] sm:$0xf]
      %v774 = vld [vmem:[%s3 + $0x8] sm:$0xf]
      %v775 = vld [vmem:[%s3 + $0xc] sm:$0xf]
      %v776 = vpack.c.bf16 %v760, %v756
      %v777 = vpack.c.bf16 %v761, %v757
      %v778 = vpack.c.bf16 %v762, %v758
      %v779 = vpack.c.bf16 %v763, %v759
      %v780 = vpack.c.bf16 %v768, %v764
      %v781 = vpack.c.bf16 %v769, %v765
      %v782 = vpack.c.bf16 %v770, %v766
      %v783 = vpack.c.bf16 %v771, %v767
      %v784 = vld [vmem:[%s4] sm:$0xff]
      %v785 = vld [vmem:[%s4 + $0x8] sm:$0xff]
      %v786 = vld [vmem:[%s4 + $0x10] sm:$0xff]
      %v787 = vld [vmem:[%s4 + $0x18] sm:$0xff]
      %789 = vset.pattern.permute.xlu0 0
      %790 = vperm.xlu0 %789, %v784
      %v791 = vpop.permute.xlu0 %790
      %794 = vset.pattern.permute.xlu0 0
      %795 = vperm.xlu0 %794, %v785
      %v796 = vpop.permute.xlu0 %795
      %799 = vset.pattern.permute.xlu0 0
      %800 = vperm.xlu0 %799, %v786
      %v801 = vpop.permute.xlu0 %800
      %804 = vset.pattern.permute.xlu0 0
      %805 = vperm.xlu0 %804, %v787
      %v806 = vpop.permute.xlu0 %805
      %v812 = vunpack.c.l.b16 %v772
      %v813 = vunpack.c.l.b16 %v773
      %v814 = vunpack.c.l.b16 %v774
      %v815 = vunpack.c.l.b16 %v775
      %v816 = vpack.c.b16 %v813, %v812
      %v817 = vpack.c.b16 %v815, %v814
      %vm818 = vcmask 261120
      %v820 = vsel %vm818, %v816, 0
      %v823 = vsel %vm818, %v817, 0
      %825 = vmatpush.bf16.msra.mxu0 0
      %826 = vmatpush.bf16.msra.mxu0 0
      %827 = vmatpush.bf16.msra.mxu0 0
      %828 = vmatpush.bf16.msra.mxu0 0
      %829 = vmatpush.bf16.msra.mxu0 0
      %830 = vmatpush.bf16.msra.mxu0 0
      %831 = vmatpush.bf16.msra.mxu0 %v780
      %832 = vmatpush.bf16.msra.mxu0 %v776
      %833 = vmatmul.bf16.gmra.mxu0 %v820
      %v834 = vpop.f32.mrf.mxu0
      %v835 = vadd.f32 %v791, %v834
      %v836 = vpop.f32.mrf.mxu0
      %v837 = vadd.f32 %v796, %v836
      %838 = vmatmul.bf16.gmra.mxu0 %v823
      %v839 = vpop.f32.mrf.mxu0
      %v840 = vadd.f32 %v801, %v839
      %v841 = vpop.f32.mrf.mxu0
      %v842 = vadd.f32 %v806, %v841
      %843 = vdwg.mxu0
      %844 = vmatpush.bf16.msra.mxu0 0
      %845 = vmatpush.bf16.msra.mxu0 0
      %846 = vmatpush.bf16.msra.mxu0 0
      %847 = vmatpush.bf16.msra.mxu0 0
      %848 = vmatpush.bf16.msra.mxu0 0
      %849 = vmatpush.bf16.msra.mxu0 0
      %850 = vmatpush.bf16.msra.mxu0 %v781
      %851 = vmatpush.bf16.msra.mxu0 %v777
      %852 = vmatmul.bf16.gmra.mxu0 %v820
      %v853 = vpop.f32.mrf.mxu0
      %v854 = vadd.f32 %v791, %v853
      %v855 = vpop.f32.mrf.mxu0
      %v856 = vadd.f32 %v796, %v855
      %857 = vmatmul.bf16.gmra.mxu0 %v823
      %v858 = vpop.f32.mrf.mxu0
      %v859 = vadd.f32 %v801, %v858
      %v860 = vpop.f32.mrf.mxu0
      %v861 = vadd.f32 %v806, %v860
      %862 = vdwg.mxu0
      %863 = vmatpush.bf16.msra.mxu0 0
      %864 = vmatpush.bf16.msra.mxu0 0
      %865 = vmatpush.bf16.msra.mxu0 0
      %866 = vmatpush.bf16.msra.mxu0 0
      %867 = vmatpush.bf16.msra.mxu0 0
      %868 = vmatpush.bf16.msra.mxu0 0
      %869 = vmatpush.bf16.msra.mxu0 %v782
      %870 = vmatpush.bf16.msra.mxu0 %v778
      %871 = vmatmul.bf16.gmra.mxu0 %v820
      %v872 = vpop.f32.mrf.mxu0
      %v873 = vadd.f32 %v791, %v872
      %v874 = vpop.f32.mrf.mxu0
      %v875 = vadd.f32 %v796, %v874
      %876 = vmatmul.bf16.gmra.mxu0 %v823
      %v877 = vpop.f32.mrf.mxu0
      %v878 = vadd.f32 %v801, %v877
      %v879 = vpop.f32.mrf.mxu0
      %v880 = vadd.f32 %v806, %v879
      %881 = vdwg.mxu0
      %882 = vmatpush.bf16.msra.mxu0 0
      %883 = vmatpush.bf16.msra.mxu0 0
      %884 = vmatpush.bf16.msra.mxu0 0
      %885 = vmatpush.bf16.msra.mxu0 0
      %886 = vmatpush.bf16.msra.mxu0 0
      %887 = vmatpush.bf16.msra.mxu0 0
      %888 = vmatpush.bf16.msra.mxu0 %v783
      %889 = vmatpush.bf16.msra.mxu0 %v779
      %890 = vmatmul.bf16.gmra.mxu0 %v820
      %v891 = vpop.f32.mrf.mxu0
      %v892 = vadd.f32 %v791, %v891
      %v893 = vpop.f32.mrf.mxu0
      %v894 = vadd.f32 %v796, %v893
      %895 = vmatmul.bf16.gmra.mxu0 %v823
      %v896 = vpop.f32.mrf.mxu0
      %v897 = vadd.f32 %v801, %v896
      %v898 = vpop.f32.mrf.mxu0
      %v899 = vadd.f32 %v806, %v898
      %900 = vdwg.mxu0
      %v901 = vmax.f32 %v835, 0.0
      %v902 = vmax.f32 %v854, 0.0
      %v903 = vmax.f32 %v873, 0.0
      %v904 = vmax.f32 %v892, 0.0
      %v905 = vmax.f32 %v837, 0.0
      %v906 = vmax.f32 %v856, 0.0
      %v907 = vmax.f32 %v875, 0.0
      %v908 = vmax.f32 %v894, 0.0
      %v909 = vmax.f32 %v840, 0.0
      %v910 = vmax.f32 %v859, 0.0
      %v911 = vmax.f32 %v878, 0.0
      %v912 = vmax.f32 %v897, 0.0
      %v913 = vmax.f32 %v842, 0.0
      %v914 = vmax.f32 %v861, 0.0
      %v915 = vmax.f32 %v880, 0.0
      %v916 = vmax.f32 %v899, 0.0
      %v917 = vld [vmem:[%s5] sm:$0xf]
      %v918 = vld [vmem:[%s5 + $0x4] sm:$0xf]
      %v919 = vld [vmem:[%s5 + $0x8] sm:$0xf]
      %v920 = vpack.c.bf16 %v905, %v901
      %v921 = vpack.c.bf16 %v906, %v902
      %v922 = vpack.c.bf16 %v907, %v903
      %v923 = vpack.c.bf16 %v908, %v904
      %v924 = vpack.c.bf16 %v913, %v909
      %v925 = vpack.c.bf16 %v914, %v910
      %v926 = vpack.c.bf16 %v915, %v911
      %v927 = vpack.c.bf16 %v916, %v912
      %v928 = vld [vmem:[%s6] sm:$0xff]
      %v929 = vld [vmem:[%s6 + $0x8] sm:$0xff]
      %v930 = vld [vmem:[%s6 + $0x10] sm:$0xff]
      %932 = vset.pattern.permute.xlu0 0
      %933 = vperm.xlu0 %932, %v928
      %v934 = vpop.permute.xlu0 %933
      %937 = vset.pattern.permute.xlu0 0
      %938 = vperm.xlu0 %937, %v929
      %v939 = vpop.permute.xlu0 %938
      %942 = vset.pattern.permute.xlu0 0
      %943 = vperm.xlu0 %942, %v930
      %v944 = vpop.permute.xlu0 %943
      %v949 = vunpack.c.l.b16 %v917
      %v950 = vunpack.c.l.b16 %v918
      %v951 = vunpack.c.l.b16 %v919
      %v952 = vpack.c.b16 %v950, %v949
      %v953 = vpack.c.b16 %v951, %v951
      %v955 = vsel %vm818, %v952, 0
      %v958 = vsel %vm818, %v953, 0
      %960 = vmatpush.bf16.msra.mxu0 0
      %961 = vmatpush.bf16.msra.mxu0 0
      %962 = vmatpush.bf16.msra.mxu0 0
      %963 = vmatpush.bf16.msra.mxu0 0
      %964 = vmatpush.bf16.msra.mxu0 0
      %965 = vmatpush.bf16.msra.mxu0 0
      %966 = vmatpush.bf16.msra.mxu0 %v924
      %967 = vmatpush.bf16.msra.mxu0 %v920
      %968 = vmatmul.bf16.gmra.mxu0 %v955
      %v969 = vpop.f32.mrf.mxu0
      %v970 = vadd.f32 %v934, %v969
      %v971 = vpop.f32.mrf.mxu0
      %v972 = vadd.f32 %v939, %v971
      %973 = vmatmul.bf16.gmra.mxu0 %v958
      %v974 = vpop.f32.mrf.mxu0
      %v975 = vadd.f32 %v944, %v974
      %v976 = vpop.f32.mrf.mxu0
      %977 = vdwg.mxu0
      %978 = vmatpush.bf16.msra.mxu0 0
      %979 = vmatpush.bf16.msra.mxu0 0
      %980 = vmatpush.bf16.msra.mxu0 0
      %981 = vmatpush.bf16.msra.mxu0 0
      %982 = vmatpush.bf16.msra.mxu0 0
      %983 = vmatpush.bf16.msra.mxu0 0
      %984 = vmatpush.bf16.msra.mxu0 %v925
      %985 = vmatpush.bf16.msra.mxu0 %v921
      %986 = vmatmul.bf16.gmra.mxu0 %v955
      %v987 = vpop.f32.mrf.mxu0
      %v988 = vadd.f32 %v934, %v987
      %v989 = vpop.f32.mrf.mxu0
      %v990 = vadd.f32 %v939, %v989
      %991 = vmatmul.bf16.gmra.mxu0 %v958
      %v992 = vpop.f32.mrf.mxu0
      %v993 = vadd.f32 %v944, %v992
      %v994 = vpop.f32.mrf.mxu0
      %995 = vdwg.mxu0
      %996 = vmatpush.bf16.msra.mxu0 0
      %997 = vmatpush.bf16.msra.mxu0 0
      %998 = vmatpush.bf16.msra.mxu0 0
      %999 = vmatpush.bf16.msra.mxu0 0
      %1000 = vmatpush.bf16.msra.mxu0 0
      %1001 = vmatpush.bf16.msra.mxu0 0
      %1002 = vmatpush.bf16.msra.mxu0 %v926
      %1003 = vmatpush.bf16.msra.mxu0 %v922
      %1004 = vmatmul.bf16.gmra.mxu0 %v955
      %v1005 = vpop.f32.mrf.mxu0
      %v1006 = vadd.f32 %v934, %v1005
      %v1007 = vpop.f32.mrf.mxu0
      %v1008 = vadd.f32 %v939, %v1007
      %1009 = vmatmul.bf16.gmra.mxu0 %v958
      %v1010 = vpop.f32.mrf.mxu0
      %v1011 = vadd.f32 %v944, %v1010
      %v1012 = vpop.f32.mrf.mxu0
      %1013 = vdwg.mxu0
      %1014 = vmatpush.bf16.msra.mxu0 0
      %1015 = vmatpush.bf16.msra.mxu0 0
      %1016 = vmatpush.bf16.msra.mxu0 0
      %1017 = vmatpush.bf16.msra.mxu0 0
      %1018 = vmatpush.bf16.msra.mxu0 0
      %1019 = vmatpush.bf16.msra.mxu0 0
      %1020 = vmatpush.bf16.msra.mxu0 %v927
      %1021 = vmatpush.bf16.msra.mxu0 %v923
      %1022 = vmatmul.bf16.gmra.mxu0 %v955
      %v1023 = vpop.f32.mrf.mxu0
      %v1024 = vadd.f32 %v934, %v1023
      %v1025 = vpop.f32.mrf.mxu0
      %v1026 = vadd.f32 %v939, %v1025
      %1027 = vmatmul.bf16.gmra.mxu0 %v958
      %v1028 = vpop.f32.mrf.mxu0
      %v1029 = vadd.f32 %v944, %v1028
      %v1030 = vpop.f32.mrf.mxu0
      %1031 = vdwg.mxu0
      %1032 = vst [vmem:[%s316] sm:$0xff] %v970
      %1033 = vst [vmem:[%s316 + $0x8] sm:$0xff] %v988
      %1034 = vst [vmem:[%s316 + $0x10] sm:$0xff] %v1006
      %1035 = vst [vmem:[%s316 + $0x18] sm:$0xff] %v1024
      %1036 = vst [vmem:[%s316 + $0x20] sm:$0xff] %v972
      %1037 = vst [vmem:[%s316 + $0x28] sm:$0xff] %v990
      %1038 = vst [vmem:[%s316 + $0x30] sm:$0xff] %v1008
      %1039 = vst [vmem:[%s316 + $0x38] sm:$0xff] %v1026
      %1040 = vst [vmem:[%s316 + $0x40] sm:$0xff] %v975
      %1041 = vst [vmem:[%s316 + $0x48] sm:$0xff] %v993
      %1042 = vst [vmem:[%s316 + $0x50] sm:$0xff] %v1011
      %1043 = vst [vmem:[%s316 + $0x58] sm:$0xff] %v1029
      %s1044 = smul.u32 4, %s23
      %p1045 = scmp.lt.s32.totalorder %s22, 1
      %s1046 = scalar_select %p1045, %s22, 1
      %p1047 = scmp.lt.s32.totalorder %s1044, 3
      %s1048 = scalar_select %p1047, %s1044, 3
      %s1049 = smul.addr %s1046, 12
      %s1050 = sadd.s32 %s1048, %s1049
      %s1051 = smul.addr %s1050, 8
      %s1052 = scalar_lea.vmem %s7, %s1051
      // Predicated region
      $region49: #{pulsenet_forward.1} parent=47 // pred_check
        %p1053 = pneg %p204
      $region50: #{pulsenet_forward.1} parent=47 // pred_check_branch
        %1055 = sbr.rel (%p1053) target = $region52
      $region51: #{pulsenet_forward.1} parent=47 // pred_region
        %s1056 = smul.u32 4, %s23
      $region52: #{pulsenet_forward.1} parent=47 // pred_fallthru
        _
    $region48: #{pulsenet_forward.1} parent=5 // pred_fallthru
      _
    %p1057 = scmp.le.s32.totalorder 2, %s13
    // Predicated region
    $region53: #{pulsenet_forward.1} parent=5 // pred_check
      %p1058 = pneg %p1057
    $region54: #{pulsenet_forward.1} parent=5 // pred_check_branch
      %1060 = sbr.rel (%p1058) target = $region56
    $region55: #{pulsenet_forward.1} parent=5 // pred_region
      %s1061 = ssub.s32 %s13, 2
      // Predicated region
      $region57: #{pulsenet_forward.1} parent=55 // pred_check
        %p1062 = pneg %p210
      $region58: #{pulsenet_forward.1} parent=55 // pred_check_branch
        %1064 = sbr.rel (%p1062) target = $region60
      $region59: #{pulsenet_forward.1} parent=55 // pred_region
        %s1065 = smul.u32 4, %s25
        %p1066 = scmp.lt.s32.totalorder %s24, 1
        %s1067 = scalar_select %p1066, %s24, 1
        %p1068 = scmp.lt.s32.totalorder %s1065, 3
        %s1069 = scalar_select %p1068, %s1065, 3
        %s1070 = smul.addr %s1067, 12
        %s1071 = sadd.s32 %s1069, %s1070
        %s1072 = smul.addr %s1071, 8
        %s1073 = scalar_lea.vmem %s7, %s1072
      $region60: #{pulsenet_forward.1} parent=55 // pred_fallthru
        _
    $region56: #{pulsenet_forward.1} parent=5 // pred_fallthru
      _
  $region6: #{pulsenet_forward.1} parent=0 // loop_footer
    %s17 = sadd.s32 1, %s13
  $region7: #{pulsenet_forward.1} parent=0 // loop_footer_branch
    %12 = sbr.rel target = $region3
  $region8: #{pulsenet_forward.1} parent=0 // loop_exit
    _

</llo_original>
